<compile_context>
chip_gen: v5e
topology: v5e:2x2
jax: 0.10.0
libtpu: 0.0.40
codegen_flags: <defaults>
</compile_context>

<pallas_src>
import functools
import math

import jax
import jax.numpy as jnp
from jax.experimental import pallas as pl
from jax.experimental.pallas import tpu as pltpu

_LANES = 128
_SUBLANES = 8
# Conservative count of block-sized f32 intermediates (hi/lo splits, mean,
# diff, diff^2, var, scaled output) live in VMEM while the body executes.
_INTERMEDIATE_TILES = 7


def _cdiv(a, b):
    return (a + b - 1) // b


def _round_up(a, b):
    return _cdiv(a, b) * b


@functools.lru_cache(maxsize=None)
def _detect_num_tensorcores():
    """Best-effort TensorCores per device (v7x: 2, v5e/v6e: 1)."""
    try:
        info = pltpu.get_tpu_info()
        for name in ("num_cores", "core_count", "num_tensorcores",
                     "tensorcore_count", "num_tensor_cores"):
            val = getattr(info, name, None)
            if isinstance(val, int) and val > 0:
                return max(1, min(2, val))
    except Exception:
        pass
    try:
        kind = jax.devices()[0].device_kind.lower()
        if "v7" in kind or "7x" in kind:
            return 2
    except Exception:
        pass
    return 1


@functools.lru_cache(maxsize=None)
def _default_vmem_budget_bytes():
    """Chip-aware per-call VMEM budget, leaving >=24 MiB physical headroom."""
    try:
        cap = int(pltpu.get_tpu_info().vmem_capacity_bytes)
    except Exception:
        cap = 0
    if cap <= 0:
        return 36 << 20          # safe fallback (fits v7x's 64 MiB physical VMEM)
    return int(min(72 << 20, max(24 << 20, cap - (24 << 20))))


def _pick_block_rows(total_rows, per_row_vmem_bytes, vmem_budget_bytes,
                     num_cores):
    """Rows per tile under the VMEM budget; multiple of 8 unless single-block."""
    br = (vmem_budget_bytes // max(1, per_row_vmem_bytes)) \
        // _SUBLANES * _SUBLANES
    br = max(_SUBLANES, br)
    if num_cores > 1:
        # >= 2 grid steps per TensorCore so every core keeps double-buffering
        # (a single step per core would fully expose its DMA).
        min_steps = 2 * num_cores
        if total_rows >= min_steps * _SUBLANES:
            cap = max(_SUBLANES,
                      (_cdiv(total_rows, min_steps) // _SUBLANES) * _SUBLANES)
            br = min(br, cap)
    if br >= total_rows:
        return total_rows        # single full-extent block: always a legal shape
    return br


def _split_matmul(x_f32, m_bf16, *, skip_lo=False):
    """x @ m on the MXU with f32 accumulation, ~2^-18 relative error.

    The f32 operand is split into bf16 hi + lo halves so the native bf16 MXU
    path is used.  `skip_lo=True` drops the exactly-zero lo term when the
    original input was bf16 (saves one matmul + the sub/cast per element).
    """
    hi = x_f32.astype(jnp.bfloat16)
    out = jnp.dot(hi, m_bf16, preferred_element_type=jnp.float32)
    if not skip_lo:
        lo = (x_f32 - hi.astype(jnp.float32)).astype(jnp.bfloat16)
        out = out + jnp.dot(lo, m_bf16, preferred_element_type=jnp.float32)
    return out


def _ln_packed_kernel(x_ref, g_ref, b_ref, seg_ref, o_ref, *, w, eps,
                      input_is_bf16):
    """S = 128 // w logical rows packed per 128-lane row; segmented stats.

    Per-segment sums use a block-diagonal-ones matmul on the otherwise-idle
    MXU.  Rows (sublanes) are independent, so garbage in the masked partial
    last grid block cannot leak into valid rows.
    """
    x = x_ref[...].astype(jnp.float32)          # (block_r, 128)
    seg = seg_ref[...]                          # (128, 128) bf16 block-diag ones
    gamma = g_ref[...].astype(jnp.float32)      # (1, 128)  (gamma tiled S times)
    beta = b_ref[...].astype(jnp.float32)

    inv_w = jnp.float32(1.0 / w)
    # TODO(synk): w == 1 keeps torch.std(unbiased=True) semantics (NaN output).
    inv_wm1 = jnp.float32(1.0 / (w - 1)) if w > 1 else jnp.float32(float("nan"))

    mean = _split_matmul(x, seg, skip_lo=input_is_bf16) * inv_w
    diff = x - mean
    var = _split_matmul(diff * diff, seg) * inv_wm1        # unbiased (N-1)
    denom = jnp.sqrt(var) + jnp.float32(eps)               # eps on std (torch)
    inv = pl.reciprocal(denom, approx=True)                # EUP slot, not VALU
    inv = inv * (2.0 - denom * inv)                        # 1 Newton step -> f32
    o_ref[...] = ((diff * inv) * gamma + beta).astype(o_ref.dtype)


def _ln_rows_kernel(x_ref, g_ref, b_ref, ones_ref, o_ref, *, eps,
                    input_is_bf16):
    """One normalization row per vector row (w >= 128 or 128 % w != 0).

    Row reductions go through the MXU (ones matmul: reduce + lane-broadcast in
    one op) instead of XLU cross-lane reductions; lane 0 of the matmul result
    is the per-row statistic.
    """
    x = x_ref[...].astype(jnp.float32)          # (block_r, w)
    w = x.shape[-1]
    ones = ones_ref[...]                        # (w, 128) bf16
    gamma = g_ref[...].astype(jnp.float32)      # (1, w)
    beta = b_ref[...].astype(jnp.float32)

    inv_w = jnp.float32(1.0 / w)
    inv_wm1 = jnp.float32(1.0 / (w - 1)) if w > 1 else jnp.float32(float("nan"))

    mean = _split_matmul(x, ones, skip_lo=input_is_bf16)[:, :1] * inv_w
    diff = x - mean
    var = _split_matmul(diff * diff, ones)[:, :1] * inv_wm1
    # inv is only (block_r, 1) here -- 1/w of the elementwise work -- so the
    # exact divide is already cheap; keep full accuracy.
    inv = 1.0 / (jnp.sqrt(var) + jnp.float32(eps))
    o_ref[...] = ((diff * inv) * gamma + beta).astype(o_ref.dtype)


def layer_norm_2d(x, gamma, beta, eps=1e-6, *,
                  vmem_budget_bytes=None, num_cores=None):
    """LayerNorm2d forward. x: (..., W); gamma, beta: (W,)."""
    orig_shape = x.shape
    w = orig_shape[-1]
    rows = int(math.prod(orig_shape[:-1]))
    x2d = x.reshape(rows, w)
    itemsize = jnp.dtype(x.dtype).itemsize
    input_is_bf16 = x.dtype == jnp.bfloat16

    if num_cores is None:
        num_cores = _detect_num_tensorcores()
    if vmem_budget_bytes is None:
        vmem_budget_bytes = _default_vmem_budget_bytes()

    pack = (w < _LANES) and (_LANES % w == 0)
    s = _LANES // w if pack else 1              # logical rows per packed row
    packed_w = _LANES if pack else w

    if pack:
        rows_pad = _round_up(rows, s)
        if rows_pad != rows:
            # TODO(synk): only ragged rows % (128//W) != 0 shapes pay this extra
            # HBM pad/slice pass; aligned shapes are copy-free.
            x2d = jnp.pad(x2d, ((0, rows_pad - rows), (0, 0)))
        # Contiguous row-major reshape: free; every 128-lane vector row now
        # carries `s` logical normalization rows -> lane-dense loads/stores.
        xp = x2d.reshape(rows_pad // s, _LANES)
        packed_rows = rows_pad // s
    else:
        rows_pad = rows
        xp = x2d
        packed_rows = rows

    # VMEM cost per block row: double-buffered in + out tiles plus block-sized
    # f32 intermediates Mosaic materializes while the body runs.
    per_row = (2 * packed_w * itemsize + 2 * packed_w * itemsize
               + _INTERMEDIATE_TILES * packed_w * 4)
    block_r = _pick_block_rows(packed_rows, per_row, vmem_budget_bytes,
                               num_cores)
    grid = (pl.cdiv(packed_rows, block_r),)

    g2 = jnp.tile(gamma.reshape(1, w), (1, s))      # (1, packed_w)
    b2 = jnp.tile(beta.reshape(1, w), (1, s))

    inputs = [xp, g2, b2]
    in_specs = [
        pl.BlockSpec((block_r, packed_w), lambda i: (i, 0)),
        pl.BlockSpec((1, packed_w), lambda i: (0, 0)),
        pl.BlockSpec((1, packed_w), lambda i: (0, 0)),
    ]
    if pack:
        lane = jnp.arange(_LANES, dtype=jnp.int32)
        seg = (lane[:, None] // w == lane[None, :] // w).astype(jnp.bfloat16)
        inputs.append(seg)
        in_specs.append(pl.BlockSpec((_LANES, _LANES), lambda i: (0, 0)))
        kernel = functools.partial(_ln_packed_kernel, w=w, eps=eps,
                                   input_is_bf16=input_is_bf16)
    else:
        ones = jnp.ones((w, _LANES), dtype=jnp.bfloat16)
        inputs.append(ones)
        in_specs.append(pl.BlockSpec((w, _LANES), lambda i: (0, 0)))
        kernel = functools.partial(_ln_rows_kernel, eps=eps,
                                   input_is_bf16=input_is_bf16)

    # Estimated peak VMEM for the chosen tile (I/O double-buffers + block-sized
    # intermediates) plus params / headroom.  block_r was sized against the
    # same formula, so this stays within the chip-aware budget, which itself
    # keeps >= 24 MiB of physical-VMEM headroom (v7x included).
    est = block_r * per_row + (3 << 20)
    vmem_limit = int(max(16 << 20, est))

    out = pl.pallas_call(
        kernel,
        out_shape=jax.ShapeDtypeStruct((packed_rows, packed_w), x.dtype),
        grid_spec=pltpu.PrefetchScalarGridSpec(
            num_scalar_prefetch=0,
            grid=grid,
            in_specs=in_specs,
            out_specs=pl.BlockSpec((block_r, packed_w), lambda i: (i, 0)),
        ),
        compiler_params=pltpu.CompilerParams(
            dimension_semantics=("parallel",),
            vmem_limit_bytes=vmem_limit,
        ),
    )(*inputs)

    if pack:
        out = out.reshape(rows_pad, w)
        if rows_pad != rows:
            out = out[:rows]
    return out.reshape(orig_shape)


def layer_norm_2d_ref(x, gamma, beta, eps=1e-6):
    """Pure-JAX reference matching the PyTorch forward exactly."""
    xf = x.astype(jnp.float32)
    mean = jnp.mean(xf, axis=-1, keepdims=True)
    std = jnp.std(xf, axis=-1, keepdims=True, ddof=1)
    return (gamma * (xf - mean) / (std + eps) + beta).astype(x.dtype)


if __name__ == "__main__":
    key = jax.random.PRNGKey(0)
    keys = jax.random.split(key, 15)

    def check(shape, kx, kg, kb, **kwargs):
        w = shape[-1]
        x = jax.random.normal(kx, shape, dtype=jnp.float32)
        gamma = 1.0 + 0.1 * jax.random.normal(kg, (w,), dtype=jnp.float32)
        beta = 0.1 * jax.random.normal(kb, (w,), dtype=jnp.float32)
        out = jax.block_until_ready(
            layer_norm_2d(x, gamma, beta, eps=1e-6, **kwargs))
        ref = layer_norm_2d_ref(x, gamma, beta, eps=1e-6)
        assert out.shape == x.shape and out.dtype == x.dtype
        err = jnp.max(jnp.abs(out - ref))
        assert jnp.allclose(out, ref, atol=2e-5, rtol=2e-5), (
            f"mismatch for shape {shape}: max abs err {err}")

    # Main case: NCHW with features == W == 16 (lane-packed MXU path).
    check((2, 4, 16, 16), keys[0], keys[1], keys[2])
    # Ragged row count (rows = 15): exercises the pad-to-packing-factor path.
    check((1, 3, 5, 16), keys[3], keys[4], keys[5])
    # Wide features (W = 256): lane-dense row-wise path with MXU reductions.
    check((2, 3, 8, 256), keys[6], keys[7], keys[8])
    # Packed path with a forced multi-step grid, the 2-TensorCore step rule and
    # a masked partial last block (packed_rows = 15, block_r = 8, no host pad).
    check((1, 3, 40, 16), keys[9], keys[10], keys[11],
          vmem_budget_bytes=64 << 10, num_cores=2)
    # Rows path with a multi-step grid and a masked partial last block
    # (rows = 25, block_r = 8, no host pad / output slice).
    check((5, 1, 5, 256), keys[12], keys[13], keys[14],
          vmem_budget_bytes=96 << 10)

    print("KERNEL_OK")
</pallas_src>

<mosaic_0001>
module attributes {stable_mosaic.version = 11 : i64} {
  func.func @_ln_packed_kernel(%arg0: i32, %arg1: memref<16x128xf32, #tpu.memory_space<vmem>>, %arg2: memref<1x128xf32, #tpu.memory_space<vmem>>, %arg3: memref<1x128xf32, #tpu.memory_space<vmem>>, %arg4: memref<128x128xbf16, #tpu.memory_space<vmem>>, %arg5: memref<16x128xf32, #tpu.memory_space<vmem>>) attributes {dimension_semantics = [#tpu.dimension_semantics<parallel>], iteration_bounds = array<i64: 1>, scalar_prefetch = 0 : i64, scratch_operands = 0 : i64, tpu.core_type = #tpu.core_type<tc>, window_params = [{transform_indices = @transform_0, window_bounds = array<i64: 16, 128>}, {pipeline_mode = #tpu.pipeline_mode<synchronous>, transform_indices = @transform_1, window_bounds = array<i64: 1, 128>}, {pipeline_mode = #tpu.pipeline_mode<synchronous>, transform_indices = @transform_2, window_bounds = array<i64: 1, 128>}, {pipeline_mode = #tpu.pipeline_mode<synchronous>, transform_indices = @transform_3, window_bounds = array<i64: 128, 128>}, {transform_indices = @transform_4, window_bounds = array<i64: 16, 128>}]} {
    %c0 = arith.constant 0 : index
    %c0_0 = arith.constant 0 : index
    %0 = vector.load %arg1[%c0, %c0_0] : memref<16x128xf32, #tpu.memory_space<vmem>>, vector<16x128xf32>
    %c0_1 = arith.constant 0 : index
    %c0_2 = arith.constant 0 : index
    %1 = vector.load %arg4[%c0_1, %c0_2] : memref<128x128xbf16, #tpu.memory_space<vmem>>, vector<128x128xbf16>
    %c0_3 = arith.constant 0 : index
    %c0_4 = arith.constant 0 : index
    %2 = vector.load %arg2[%c0_3, %c0_4] : memref<1x128xf32, #tpu.memory_space<vmem>>, vector<1x128xf32>
    %c0_5 = arith.constant 0 : index
    %c0_6 = arith.constant 0 : index
    %3 = vector.load %arg3[%c0_5, %c0_6] : memref<1x128xf32, #tpu.memory_space<vmem>>, vector<1x128xf32>
    %4 = arith.truncf %0 : vector<16x128xf32> to vector<16x128xbf16>
    %cst = arith.constant dense<0.000000e+00> : vector<16x128xf32>
    %5 = tpu.matmul %4, %1, %cst {dimension_numbers = #tpu.dot_dimension_numbers<[1], [0], [0], [1], [0, 0, 1, 1], [], []>} : vector<16x128xbf16>, vector<128x128xbf16>, vector<16x128xf32> -> vector<16x128xf32>
    %6 = arith.extf %4 : vector<16x128xbf16> to vector<16x128xf32>
    %7 = arith.subf %0, %6 : vector<16x128xf32>
    %8 = arith.truncf %7 : vector<16x128xf32> to vector<16x128xbf16>
    %cst_7 = arith.constant dense<0.000000e+00> : vector<16x128xf32>
    %9 = tpu.matmul %8, %1, %cst_7 {dimension_numbers = #tpu.dot_dimension_numbers<[1], [0], [0], [1], [0, 0, 1, 1], [], []>} : vector<16x128xbf16>, vector<128x128xbf16>, vector<16x128xf32> -> vector<16x128xf32>
    %10 = arith.addf %5, %9 : vector<16x128xf32>
    %cst_8 = arith.constant 6.250000e-02 : f32
    %11 = vector.broadcast %cst_8 : f32 to vector<16x128xf32>
    %12 = arith.mulf %10, %11 : vector<16x128xf32>
    %13 = arith.subf %0, %12 : vector<16x128xf32>
    %14 = arith.mulf %13, %13 : vector<16x128xf32>
    %15 = arith.truncf %14 : vector<16x128xf32> to vector<16x128xbf16>
    %cst_9 = arith.constant dense<0.000000e+00> : vector<16x128xf32>
    %16 = tpu.matmul %15, %1, %cst_9 {dimension_numbers = #tpu.dot_dimension_numbers<[1], [0], [0], [1], [0, 0, 1, 1], [], []>} : vector<16x128xbf16>, vector<128x128xbf16>, vector<16x128xf32> -> vector<16x128xf32>
    %17 = arith.extf %15 : vector<16x128xbf16> to vector<16x128xf32>
    %18 = arith.subf %14, %17 : vector<16x128xf32>
    %19 = arith.truncf %18 : vector<16x128xf32> to vector<16x128xbf16>
    %cst_10 = arith.constant dense<0.000000e+00> : vector<16x128xf32>
    %20 = tpu.matmul %19, %1, %cst_10 {dimension_numbers = #tpu.dot_dimension_numbers<[1], [0], [0], [1], [0, 0, 1, 1], [], []>} : vector<16x128xbf16>, vector<128x128xbf16>, vector<16x128xf32> -> vector<16x128xf32>
    %21 = arith.addf %16, %20 : vector<16x128xf32>
    %cst_11 = arith.constant 0.0666666701 : f32
    %22 = vector.broadcast %cst_11 : f32 to vector<16x128xf32>
    %23 = arith.mulf %21, %22 : vector<16x128xf32>
    %24 = math.sqrt %23 : vector<16x128xf32>
    %cst_12 = arith.constant 9.99999997E-7 : f32
    %25 = vector.broadcast %cst_12 : f32 to vector<16x128xf32>
    %26 = arith.addf %24, %25 : vector<16x128xf32>
    %27 = tpu.reciprocal %26 {approx = true} : vector<16x128xf32> -> vector<16x128xf32>
    %28 = arith.mulf %26, %27 : vector<16x128xf32>
    %cst_13 = arith.constant 2.000000e+00 : f32
    %29 = vector.broadcast %cst_13 : f32 to vector<16x128xf32>
    %30 = arith.subf %29, %28 : vector<16x128xf32>
    %31 = arith.mulf %27, %30 : vector<16x128xf32>
    %32 = arith.mulf %13, %31 : vector<16x128xf32>
    %33 = vector.broadcast %2 : vector<1x128xf32> to vector<16x128xf32>
    %34 = arith.mulf %32, %33 : vector<16x128xf32>
    %35 = vector.broadcast %3 : vector<1x128xf32> to vector<16x128xf32>
    %36 = arith.addf %34, %35 : vector<16x128xf32>
    %c0_14 = arith.constant 0 : index
    %c0_15 = arith.constant 0 : index
    %37 = vector.load %arg5[%c0_14, %c0_15] : memref<16x128xf32, #tpu.memory_space<vmem>>, vector<16x128xf32>
    tpu.vector_store %arg5[%c0_14, %c0_15], %36 {strides = array<i32>} : memref<16x128xf32, #tpu.memory_space<vmem>>, vector<16x128xf32>,
    return
  }
  func.func @transform_0(%arg0: i32) -> (i32, i32) {
    %c0_i32 = arith.constant 0 : i32
    %c0_i32_0 = arith.constant 0 : i32
    return %arg0, %c0_i32 : i32, i32
  }
  func.func @transform_1(%arg0: i32) -> (i32, i32) {
    %c0_i32 = arith.constant 0 : i32
    %c0_i32_0 = arith.constant 0 : i32
    %c0_i32_1 = arith.constant 0 : i32
    return %c0_i32, %c0_i32_0 : i32, i32
  }
  func.func @transform_2(%arg0: i32) -> (i32, i32) {
    %c0_i32 = arith.constant 0 : i32
    %c0_i32_0 = arith.constant 0 : i32
    %c0_i32_1 = arith.constant 0 : i32
    return %c0_i32, %c0_i32_0 : i32, i32
  }
  func.func @transform_3(%arg0: i32) -> (i32, i32) {
    %c0_i32 = arith.constant 0 : i32
    %c0_i32_0 = arith.constant 0 : i32
    %c0_i32_1 = arith.constant 0 : i32
    return %c0_i32, %c0_i32_0 : i32, i32
  }
  func.func @transform_4(%arg0: i32) -> (i32, i32) {
    %c0_i32 = arith.constant 0 : i32
    %c0_i32_0 = arith.constant 0 : i32
    return %arg0, %c0_i32 : i32, i32
  }
}

</mosaic_0001>

<llo_original>
// kernel: tpu_custom_call.1
$region0: #{tpu_custom_call.1}
  #allocation0 [shape = 'u32[]', space=smem, size = 0x4, offset = 0x4, fixed_abs, tag = 'smem constant byte address 0x4 - core index']
  #allocation1 [shape = 'u32[72,128]{1,0:T(1,128)}', space=vmem, size = 0x9000, scoped, tag = 'internal scratch']
  %s0 = inlined_call_operand.hbm [shape: f32[16,128], index: 0, kind: input, shape index: {}]
  %s1 = inlined_call_operand.hbm [shape: f32[1,128], index: 1, kind: input, shape index: {}]
  %s2 = inlined_call_operand.vmem [shape: f32[1,128], index: 2, kind: input, shape index: {}]
  %s3 = inlined_call_operand.hbm [shape: bf16[128,128], index: 3, kind: input, shape index: {}]
  %s4 = inlined_call_operand.hbm [shape: f32[16,128], index: 4, kind: output, shape index: {}]
  %s5 = sld [smem:[#allocation0]]
  $region38: #{tpu_custom_call.1} parent=0
    _
  %s7 = ssub.s32 1, %s5
  %s8 = scalar_select 0, %s7, %s5
  $region1: #{tpu_custom_call.1} parent=0
    #allocation2 [shape = 'u8[8192]{0}', space=vmem, size = 0x2000, scoped, tag = 'input window, operand 0, single buffered']
    #allocation3 [shape = 's32[1]{0}', space=sflag, size = 0x4, scoped, tag = 'scoped memory for tpu_custom_call.1']
    #allocation4 [shape = 's32[1]{0}', space=sflag, size = 0x4, scoped, tag = 'scoped memory for tpu_custom_call.1']
    #allocation5 [shape = 'u8[512]{0}', space=vmem, size = 0x400, scoped, tag = 'input window, operand 1, single buffered']
    #allocation6 [shape = 's32[1]{0}', space=sflag, size = 0x4, scoped, tag = 'scoped memory for tpu_custom_call.1']
    #allocation7 [shape = 'u8[32768]{0}', space=vmem, size = 0x8000, scoped, tag = 'input window, operand 3, single buffered']
    #allocation8 [shape = 'u8[8192]{0}', space=vmem, size = 0x2000, scoped, tag = 'output window, operand 0, single buffered']
    %9 = vsyncpa [#allocation3], 0
    %10 = vsyncpa [#allocation6], 0
    %11 = vsyncpa [#allocation4], 0
    // Predicated region
    $region2: #{tpu_custom_call.1} parent=1 // pred_check
      _
    $region3: #{tpu_custom_call.1} parent=1 // pred_check_branch
      %13 = sbr.rel (0) target = $region5
    $region4: #{tpu_custom_call.1} parent=1 // pred_region
      %15 = vsyncadd [#allocation3], 0
      %s16 = sshll.u32 %s0, 4
      %s17 = int_to_ptr.hbm [resolvable:$true] %s16
      %s18 = sshll.u32 [#allocation2], 4
      %s19 = int_to_ptr.vmem [resolvable:$true] %s18
      %24 = dma.hbm_to_vmem [thread:$0]  %s17, 256, %s19, [#allocation3], 128, 128, 8
    $region5: #{tpu_custom_call.1} parent=1 // pred_fallthru
      _
    // Predicated region
    $region6: #{tpu_custom_call.1} parent=1 // pred_check
      _
    $region7: #{tpu_custom_call.1} parent=1 // pred_check_branch
      %26 = sbr.rel (0) target = $region9
    $region8: #{tpu_custom_call.1} parent=1 // pred_region
      %28 = vsyncadd [#allocation6], 0
      %s30 = sshll.u32 %s1, 4
      %s31 = int_to_ptr.hbm [resolvable:$true] %s30
      %s32 = sshll.u32 [#allocation5], 4
      %s33 = int_to_ptr.vmem [resolvable:$true] %s32
      %35 = dma.hbm_to_vmem [thread:$0]  %s31, 16, %s33, [#allocation6]
    $region9: #{tpu_custom_call.1} parent=1 // pred_fallthru
      _
    // Predicated region
    $region10: #{tpu_custom_call.1} parent=1 // pred_check
      _
    $region11: #{tpu_custom_call.1} parent=1 // pred_check_branch
      %37 = sbr.rel (0) target = $region13
    $region12: #{tpu_custom_call.1} parent=1 // pred_region
      _
    $region13: #{tpu_custom_call.1} parent=1 // pred_fallthru
      _
    // Predicated region
    $region14: #{tpu_custom_call.1} parent=1 // pred_check
      _
    $region15: #{tpu_custom_call.1} parent=1 // pred_check_branch
      %39 = sbr.rel (0) target = $region17
    $region16: #{tpu_custom_call.1} parent=1 // pred_region
      %41 = vsyncadd [#allocation6], 0
      %s42 = sshll.u32 %s3, 4
      %s43 = int_to_ptr.hbm [resolvable:$true] %s42
      %s44 = sshll.u32 [#allocation7], 4
      %s45 = int_to_ptr.vmem [resolvable:$true] %s44
      %50 = dma.hbm_to_vmem [thread:$0]  %s43, 1024, %s45, [#allocation6], 64, 64, 4
    $region17: #{tpu_custom_call.1} parent=1 // pred_fallthru
      _
    // Predicated region
    $region18: #{tpu_custom_call.1} parent=1 // pred_check
      _
    $region19: #{tpu_custom_call.1} parent=1 // pred_check_branch
      %52 = sbr.rel (0) target = $region21
    $region20: #{tpu_custom_call.1} parent=1 // pred_region
      %54 = dma.done [#allocation3], 256
    $region21: #{tpu_custom_call.1} parent=1 // pred_fallthru
      _
    // Predicated region
    $region22: #{tpu_custom_call.1} parent=1 // pred_check
      _
    $region23: #{tpu_custom_call.1} parent=1 // pred_check_branch
      %56 = sbr.rel (0) target = $region25
    $region24: #{tpu_custom_call.1} parent=1 // pred_region
      %58 = dma.done [#allocation6], 16
    $region25: #{tpu_custom_call.1} parent=1 // pred_fallthru
      _
    // Predicated region
    $region26: #{tpu_custom_call.1} parent=1 // pred_check
      _
    $region27: #{tpu_custom_call.1} parent=1 // pred_check_branch
      %60 = sbr.rel (0) target = $region29
    $region28: #{tpu_custom_call.1} parent=1 // pred_region
      %62 = dma.done [#allocation6], 1024
    $region29: #{tpu_custom_call.1} parent=1 // pred_fallthru
      _
    %v63 = vld [vmem:[#allocation2] sm:$0xff]
    %v64 = vld [vmem:[#allocation2 + $0x8] sm:$0xff]
    %v65 = vld [vmem:[#allocation7] sm:$0xf]
    %v66 = vld [vmem:[#allocation7 + $0x4] sm:$0xf]
    %v67 = vld [vmem:[#allocation7 + $0x8] sm:$0xf]
    %v68 = vld [vmem:[#allocation7 + $0xc] sm:$0xf]
    %v69 = vld [vmem:[#allocation7 + $0x10] sm:$0xf]
    %v70 = vld [vmem:[#allocation7 + $0x14] sm:$0xf]
    %v71 = vld [vmem:[#allocation7 + $0x18] sm:$0xf]
    %v72 = vld [vmem:[#allocation7 + $0x1c] sm:$0xf]
    %v73 = vld [vmem:[#allocation7 + $0x20] sm:$0xf]
    %v74 = vld [vmem:[#allocation7 + $0x24] sm:$0xf]
    %v75 = vld [vmem:[#allocation7 + $0x28] sm:$0xf]
    %v76 = vld [vmem:[#allocation7 + $0x2c] sm:$0xf]
    %v77 = vld [vmem:[#allocation7 + $0x30] sm:$0xf]
    %v78 = vld [vmem:[#allocation7 + $0x34] sm:$0xf]
    %v79 = vld [vmem:[#allocation7 + $0x38] sm:$0xf]
    %v80 = vld [vmem:[#allocation7 + $0x3c] sm:$0xf]
    %v81 = vld [vmem:[#allocation5] sm:$0x1]
    %v82 = vld [vmem:[%s2] sm:$0x1]
    %v83 = vpack.c.bf16 %v63, %v63
    %v84 = vpack.c.bf16 %v64, %v64
    %v85 = vunpack.c.l.bf16 %v83
    %v86 = vunpack.c.l.bf16 %v84
    %v87 = vsub.f32 %v63, %v85
    %v88 = vsub.f32 %v64, %v86
    %v89 = vpack.c.bf16 %v88, %v87
    %v106 = vunpack.c.l.b16 %v65
    %v107 = vunpack.c.l.b16 %v66
    %v108 = vunpack.c.l.b16 %v67
    %v109 = vunpack.c.l.b16 %v68
    %v110 = vunpack.c.l.b16 %v69
    %v111 = vunpack.c.l.b16 %v70
    %v112 = vunpack.c.l.b16 %v71
    %v113 = vunpack.c.l.b16 %v72
    %v114 = vunpack.c.l.b16 %v73
    %v115 = vunpack.c.l.b16 %v74
    %v116 = vunpack.c.l.b16 %v75
    %v117 = vunpack.c.l.b16 %v76
    %v118 = vunpack.c.l.b16 %v77
    %v119 = vunpack.c.l.b16 %v78
    %v120 = vunpack.c.l.b16 %v79
    %v121 = vunpack.c.l.b16 %v80
    %v122 = vpack.c.b16 %v107, %v106
    %v123 = vpack.c.b16 %v109, %v108
    %v124 = vpack.c.b16 %v111, %v110
    %v125 = vpack.c.b16 %v113, %v112
    %v126 = vpack.c.b16 %v115, %v114
    %v127 = vpack.c.b16 %v117, %v116
    %v128 = vpack.c.b16 %v119, %v118
    %v129 = vpack.c.b16 %v121, %v120
    %138 = vmatpush.bf16.msra.mxu0 %v129
    %139 = vmatpush.bf16.msra.mxu0 %v128
    %140 = vmatpush.bf16.msra.mxu0 %v127
    %141 = vmatpush.bf16.msra.mxu0 %v126
    %142 = vmatpush.bf16.msra.mxu0 %v125
    %143 = vmatpush.bf16.msra.mxu0 %v124
    %144 = vmatpush.bf16.msra.mxu0 %v123
    %145 = vmatpush.bf16.msra.mxu0 %v122
    %146 = vmatmul.bf16.gmra.mxu0 %v89
    %v147 = vpop.f32.mrf.mxu0
    %v148 = vadd.f32 0.0, %v147
    %v149 = vpop.f32.mrf.mxu0
    %v150 = vadd.f32 0.0, %v149
    %151 = vdwg.mxu0
    %v154 = vunpack.c.l.b16 %v83
    %v155 = vunpack.c.l.b16 %v84
    %v156 = vpack.c.b16 %v155, %v154
    %158 = vmatpush.bf16.msra.mxu0 %v129
    %159 = vmatpush.bf16.msra.mxu0 %v128
    %160 = vmatpush.bf16.msra.mxu0 %v127
    %161 = vmatpush.bf16.msra.mxu0 %v126
    %162 = vmatpush.bf16.msra.mxu0 %v125
    %163 = vmatpush.bf16.msra.mxu0 %v124
    %164 = vmatpush.bf16.msra.mxu0 %v123
    %165 = vmatpush.bf16.msra.mxu0 %v122
    %166 = vmatmul.bf16.gmra.mxu0 %v156
    %v167 = vpop.f32.mrf.mxu0
    %v168 = vadd.f32 %v148, %v167
    %v169 = vpop.f32.mrf.mxu0
    %v170 = vadd.f32 %v150, %v169
    %171 = vdwg.mxu0
    %v172 = vmul.f32 %v168, 0.0625
    %v173 = vmul.f32 %v170, 0.0625
    %v174 = vsub.f32 %v63, %v172
    %v175 = vsub.f32 %v64, %v173
    %v176 = vmul.f32 %v174, %v174
    %v177 = vmul.f32 %v175, %v175
    %v178 = vpack.c.bf16 %v176, %v176
    %v179 = vpack.c.bf16 %v177, %v177
    %v180 = vunpack.c.l.bf16 %v178
    %v181 = vunpack.c.l.bf16 %v179
    %v182 = vsub.f32 %v176, %v180
    %v183 = vsub.f32 %v177, %v181
    %v184 = vpack.c.bf16 %v183, %v182
    %185 = vmatpush.bf16.msra.mxu0 %v129
    %186 = vmatpush.bf16.msra.mxu0 %v128
    %187 = vmatpush.bf16.msra.mxu0 %v127
    %188 = vmatpush.bf16.msra.mxu0 %v126
    %189 = vmatpush.bf16.msra.mxu0 %v125
    %190 = vmatpush.bf16.msra.mxu0 %v124
    %191 = vmatpush.bf16.msra.mxu0 %v123
    %192 = vmatpush.bf16.msra.mxu0 %v122
    %193 = vmatmul.bf16.gmra.mxu0 %v184
    %v194 = vpop.f32.mrf.mxu0
    %v195 = vadd.f32 0.0, %v194
    %v196 = vpop.f32.mrf.mxu0
    %v197 = vadd.f32 0.0, %v196
    %198 = vdwg.mxu0
    %v201 = vunpack.c.l.b16 %v178
    %v202 = vunpack.c.l.b16 %v179
    %v203 = vpack.c.b16 %v202, %v201
    %205 = vmatpush.bf16.msra.mxu0 %v129
    %206 = vmatpush.bf16.msra.mxu0 %v128
    %207 = vmatpush.bf16.msra.mxu0 %v127
    %208 = vmatpush.bf16.msra.mxu0 %v126
    %209 = vmatpush.bf16.msra.mxu0 %v125
    %210 = vmatpush.bf16.msra.mxu0 %v124
    %211 = vmatpush.bf16.msra.mxu0 %v123
    %212 = vmatpush.bf16.msra.mxu0 %v122
    %213 = vmatmul.bf16.gmra.mxu0 %v203
    %v214 = vpop.f32.mrf.mxu0
    %v215 = vadd.f32 %v195, %v214
    %v216 = vpop.f32.mrf.mxu0
    %v217 = vadd.f32 %v197, %v216
    %218 = vdwg.mxu0
    %v219 = vmul.f32 %v215, 0.06666667
    %v220 = vmul.f32 %v217, 0.06666667
    %v221 = vrsqrt.pop %v219
    %v222 = vmul.f32 %v221, %v219
    %v223 = vmul.f32 %v222, %v221
    %v224 = vmul.f32 0.5, %v223
    %v225 = vsub.f32 1.5, %v224
    %v226 = vmul.f32 %v221, %v225
    %v227 = vmul.f32 %v219, %v226
    %vm228 = vcmp.eq.f32.partialorder %v219, inf
    %v229 = vsel %vm228, %v219, %v227
    %vm230 = vcmp.eq.f32.partialorder %v219, 0.0
    %v231 = vand.u32 %v219, 2147483648
    %v232 = vsel %vm230, %v231, %v229
    %v233 = vrsqrt.pop %v220
    %v234 = vmul.f32 %v233, %v220
    %v235 = vmul.f32 %v234, %v233
    %v236 = vmul.f32 0.5, %v235
    %v237 = vsub.f32 1.5, %v236
    %v238 = vmul.f32 %v233, %v237
    %v239 = vmul.f32 %v220, %v238
    %vm240 = vcmp.eq.f32.partialorder %v220, inf
    %v241 = vsel %vm240, %v220, %v239
    %vm242 = vcmp.eq.f32.partialorder %v220, 0.0
    %v243 = vand.u32 %v220, 2147483648
    %v244 = vsel %vm242, %v243, %v241
    %v245 = vadd.f32 %v232, 1e-06
    %v246 = vadd.f32 %v244, 1e-06
    %v247 = vrcp.pop %v245
    %v248 = vrcp.pop %v246
    %v249 = vmul.f32 %v245, %v247
    %v250 = vmul.f32 %v246, %v248
    %v251 = vsub.f32 2.0, %v249
    %v252 = vsub.f32 2.0, %v250
    %v253 = vmul.f32 %v247, %v251
    %v254 = vmul.f32 %v248, %v252
    %v255 = vmul.f32 %v174, %v253
    %v256 = vmul.f32 %v175, %v254
    %v258 = vperm.slane %v81, 0
    %v260 = vmul.f32 %v255, %v258
    %v261 = vmul.f32 %v256, %v258
    %v263 = vperm.slane %v82, 0
    %v265 = vadd.f32 %v260, %v263
    %v266 = vadd.f32 %v261, %v263
    %267 = vst [vmem:[#allocation8] sm:$0xff] %v265
    %268 = vst [vmem:[#allocation8 + $0x8] sm:$0xff] %v266
    // Predicated region
    $region30: #{tpu_custom_call.1} parent=1 // pred_check
      _
    $region31: #{tpu_custom_call.1} parent=1 // pred_check_branch
      %270 = sbr.rel (0) target = $region33
    $region32: #{tpu_custom_call.1} parent=1 // pred_region
      %272 = vsyncadd [#allocation4], 0
      %s273 = sshll.u32 [#allocation8], 4
      %s274 = int_to_ptr.vmem [resolvable:$true] %s273
      %s275 = sshll.u32 %s4, 4
      %s276 = int_to_ptr.hbm [resolvable:$true] %s275
      %281 = dma.vmem_to_hbm [thread:$0]  %s274, 256, %s276, [#allocation4], 128, 128, 8
    $region33: #{tpu_custom_call.1} parent=1 // pred_fallthru
      _
    // Predicated region
    $region34: #{tpu_custom_call.1} parent=1 // pred_check
      _
    $region35: #{tpu_custom_call.1} parent=1 // pred_check_branch
      %283 = sbr.rel (0) target = $region37
    $region36: #{tpu_custom_call.1} parent=1 // pred_region
      %285 = dma.done [#allocation4], 256
    $region37: #{tpu_custom_call.1} parent=1 // pred_fallthru
      _
    %286 = vsyncpa [#allocation3], 1
    %287 = vsyncpa [#allocation6], 1
    %288 = vsyncpa [#allocation4], 1

</llo_original>
